<compile_context>
chip_gen: v6e
topology: v6e:2x2x1
jax: 0.10.0
libtpu: 0.0.40
codegen_flags: <defaults>
</compile_context>

<pallas_src>
import jax
import jax.numpy as jnp
from jax.experimental import pallas as pl
from jax.experimental.pallas import tpu as pltpu


def _round_up(a, b):
    return -(-a // b) * b


def _make_kernel(L, ks, pad, c_in, c_slab, compute_dtype):
    """Kernel over a lane-dense (channels, lanes) tile; lanes = whole batch rows."""

    def kernel(x_ref, w_ref, b_ref, lpos_ref, o_ref):
        # x_ref:    (C_in, NT)        input tile, lanes = flattened (batch, length)
        # w_ref:    (C_out, ks*c_slab) tap-stacked, channel-padded weight
        # b_ref:    (C_out, 1)        bias (f32)
        # lpos_ref: (1, NT)           position-within-sequence for each lane (int32)
        # o_ref:    (C_out, NT)       output tile
        nt = o_ref.shape[-1]
        x = x_ref[...].astype(compute_dtype)          # (c_in, nt), stays in vregs
        lpos = lpos_ref[...]                          # (1, nt) int32

        zpad = None
        if c_slab > c_in:
            zpad = jnp.zeros((c_slab - c_in, nt), compute_dtype)

        pieces = []
        for k in range(ks):
            d = k - pad                               # tap offset: needs x[l + d]
            if d == 0:
                tap = x
            else:
                # Lane rotation on the XLU brings x[l + d] to lane l; the mask
                # zeroes positions where l + d falls outside [0, L) — this is
                # what realizes the 'same' zero padding (and also blocks any
                # leakage across batch-row boundaries inside the tile).
                shifted = pltpu.roll(x, shift=(-d) % nt, axis=1)
                valid = jnp.logical_and(lpos + d >= 0, lpos + d < L)
                tap = jnp.where(valid, shifted, jnp.zeros_like(shifted))
            pieces.append(tap)
            if zpad is not None:
                pieces.append(zpad)                   # keep each tap slab 8-sublane aligned

        stacked = pieces[0] if len(pieces) == 1 else jnp.concatenate(pieces, axis=0)

        # One folded-K MXU contraction per grid step, f32 accumulation in vregs,
        # bias add fused in the epilogue, lane-dense store.
        acc = jnp.dot(w_ref[...], stacked, preferred_element_type=jnp.float32)
        o_ref[...] = (acc + b_ref[...]).astype(o_ref.dtype)

    return kernel


def conv1d_pdmd(x, weight, bias=None, *, padding_mode="same", block_batch=None,
                compute_dtype=None):
    """Conv1d with 'same' padding, stride 1 (matches Conv1d_Pdmd.forward)."""
    B, C_in, L = x.shape
    C_out, C_in_w, ks = weight.shape
    assert C_in == C_in_w
    assert padding_mode == "same" and ks % 2 == 1, "only 'same' (odd ks) supported"
    pad = ks // 2

    if bias is None:
        bias = jnp.zeros((C_out,), x.dtype)
    if compute_dtype is None:
        compute_dtype = x.dtype      # bf16 opt-in on v6e/v7x for extra HBM headroom
    compute_dtype = jnp.dtype(compute_dtype)
    out_dtype = x.dtype
    in_isz = jnp.dtype(x.dtype).itemsize
    out_isz = jnp.dtype(out_dtype).itemsize
    comp_isz = compute_dtype.itemsize

    c_slab = _round_up(C_in, 8)      # per-tap K slab padded to 8 sublanes
    K = ks * c_slab
    N = B * L

    # ---- device-generation detection (wrapper-side, plain Python) -----------
    try:
        kind = jax.devices()[0].device_kind.lower()
    except Exception:
        kind = ""
    is_v7x = ("v7" in kind) or ("7x" in kind)

    # ---- tile selection over the flattened (B*L) lane axis ------------------
    def _step_bytes(n_lanes):
        io = 2 * n_lanes * (C_in * in_isz + 4 + C_out * out_isz)      # dbl-buffered x, lpos, out
        temps = (2 * K + C_in) * n_lanes * comp_isz + C_out * n_lanes * 4
        return io + temps + C_out * (K + 1) * 4                       # + weight/bias blocks

    step_cap = (12 << 20) if is_v7x else (40 << 20)
    # multi-step candidates: tiles hold whole batch rows and are 128-lane aligned
    multi_nb = [d for d in range(1, B) if B % d == 0 and (d * L) % 128 == 0
                and _step_bytes(d * L) <= step_cap]

    if block_batch is not None:
        assert B % block_batch == 0, "block_batch must divide B"
        assert block_batch == B or (block_batch * L) % 128 == 0, \
            "tiled block_batch * L must be a multiple of 128"
        nb = block_batch
    else:
        nb = None
        if is_v7x and multi_nb:
            # v7x has 2 TensorCores: split into >=2 'parallel' steps, but only
            # when each step is big enough to amortize the per-step overhead.
            big = [d for d in multi_nb if d * L * C_in * in_isz >= (256 << 10)]
            if big:
                nb = max(big)
        if nb is None:
            # v5e / v6e (single TC) or tiny problems: fewer, larger grid steps.
            if _step_bytes(_round_up(N, 128)) <= step_cap or not multi_nb:
                nb = B
            else:
                nb = max(multi_nb)

    if nb == B:
        n_tile = _round_up(N, 128)   # single lane-dense tile (pad the tail lanes)
        grid = (1,)
    else:
        n_tile = nb * L              # already a multiple of 128
        grid = (N // n_tile,)
    n_pad = grid[0] * n_tile
    # TODO(synk): add an L-tile grid axis with a ks//2 halo for very long single
    # sequences (current tiles always hold whole batch rows).

    # ---- lane-dense operands: fold (batch, length) into the lane axis -------
    x2 = jnp.transpose(x, (1, 0, 2)).reshape(C_in, N)
    l_pos = jnp.tile(jnp.arange(L, dtype=jnp.int32), B)
    if n_pad > N:
        x2 = jnp.pad(x2, ((0, 0), (0, n_pad - N)))
        l_pos = jnp.pad(l_pos, (0, n_pad - N))
    l_pos = l_pos.reshape(1, n_pad)

    # Tap-stacked, channel-padded weight: w2[o, k*c_slab + c] = weight[o, c, k]
    w2 = jnp.transpose(weight, (0, 2, 1))             # (C_out, ks, C_in)
    if c_slab > C_in:
        w2 = jnp.pad(w2, ((0, 0), (0, 0), (0, c_slab - C_in)))
    w2 = w2.reshape(C_out, K).astype(compute_dtype)
    bias2 = bias.reshape(C_out, 1).astype(jnp.float32)

    # ---- VMEM budget (generation aware) --------------------------------------
    capacity = (64 << 20) if is_v7x else (128 << 20)
    headroom = (8 << 20) if is_v7x else (16 << 20)
    vmem_limit = int(min(max(_step_bytes(n_tile) + (4 << 20), 32 << 20),
                         capacity - headroom))

    cost = pl.CostEstimate(
        flops=2 * B * L * C_out * C_in * ks,
        transcendentals=0,
        bytes_accessed=(x2.size * in_isz + l_pos.size * 4 + w2.size * comp_isz
                        + bias2.size * 4 + C_out * n_pad * out_isz),
    )

    grid_spec = pltpu.PrefetchScalarGridSpec(
        num_scalar_prefetch=0,
        grid=grid,
        in_specs=[
            pl.BlockSpec((C_in, n_tile), lambda i: (0, i)),
            pl.BlockSpec((C_out, K), lambda i: (0, 0)),
            pl.BlockSpec((C_out, 1), lambda i: (0, 0)),
            pl.BlockSpec((1, n_tile), lambda i: (0, i)),
        ],
        out_specs=pl.BlockSpec((C_out, n_tile), lambda i: (0, i)),
    )

    kernel = _make_kernel(L, ks, pad, C_in, c_slab, compute_dtype)
    out2 = pl.pallas_call(
        kernel,
        out_shape=jax.ShapeDtypeStruct((C_out, n_pad), out_dtype),
        grid_spec=grid_spec,
        compiler_params=pltpu.CompilerParams(
            dimension_semantics=("parallel",),
            vmem_limit_bytes=vmem_limit,
        ),
        cost_estimate=cost,
    )(x2, w2, bias2, l_pos)

    if n_pad > N:
        out2 = out2[:, :N]
    return out2.reshape(C_out, B, L).transpose(1, 0, 2)


def conv1d_reference(x, weight, bias):
    """Pure-JAX reference for the correctness check."""
    B, C_in, L = x.shape
    C_out, _, ks = weight.shape
    pad = ks // 2
    x_pad = jnp.pad(x, ((0, 0), (0, 0), (pad, pad)))
    out = jnp.zeros((B, C_out, L), jnp.float32)
    for k in range(ks):
        out = out + jnp.einsum("oc,bcl->bol", weight[:, :, k], x_pad[:, :, k:k + L])
    return out + bias.reshape(1, C_out, 1)


if __name__ == "__main__":
    # Small shapes consistent with the module: D_in=4, D_out=8, ks=3, 'same' pad.
    B, D_in, D_out, ks, L = 2, 4, 8, 3, 16

    key = jax.random.PRNGKey(0)
    kx, kw, kb = jax.random.split(key, 3)
    x = jax.random.normal(kx, (B, D_in, L), dtype=jnp.float32)
    # Deterministic synthetic parameters (shapes match nn.Conv1d(D_in, D_out, ks)).
    weight = jax.random.normal(kw, (D_out, D_in, ks), dtype=jnp.float32) * 0.1
    bias = jax.random.normal(kb, (D_out,), dtype=jnp.float32) * 0.1

    out = conv1d_pdmd(x, weight, bias)
    out = jax.block_until_ready(out)

    ref = conv1d_reference(x, weight, bias)
    assert out.shape == (B, D_out, L)
    assert jnp.allclose(out, ref, atol=1e-5, rtol=1e-5), "mismatch vs reference"

    print("KERNEL_OK")
</pallas_src>

<mosaic_0001>
module attributes {stable_mosaic.version = 11 : i64} {
  func.func @kernel(%arg0: i32, %arg1: memref<4x128xf32, #tpu.memory_space<vmem>>, %arg2: memref<8x24xf32, #tpu.memory_space<vmem>>, %arg3: memref<8x1xf32, #tpu.memory_space<vmem>>, %arg4: memref<1x128xi32, #tpu.memory_space<vmem>>, %arg5: memref<8x128xf32, #tpu.memory_space<vmem>>) attributes {dimension_semantics = [#tpu.dimension_semantics<parallel>], iteration_bounds = array<i64: 1>, scalar_prefetch = 0 : i64, scratch_operands = 0 : i64, tpu.core_type = #tpu.core_type<tc>, window_params = [{transform_indices = @transform_0, window_bounds = array<i64: 4, 128>}, {pipeline_mode = #tpu.pipeline_mode<synchronous>, transform_indices = @transform_1, window_bounds = array<i64: 8, 24>}, {pipeline_mode = #tpu.pipeline_mode<synchronous>, transform_indices = @transform_2, window_bounds = array<i64: 8, 1>}, {transform_indices = @transform_3, window_bounds = array<i64: 1, 128>}, {transform_indices = @transform_4, window_bounds = array<i64: 8, 128>}]} {
    %c0 = arith.constant 0 : index
    %c0_0 = arith.constant 0 : index
    %0 = vector.load %arg1[%c0, %c0_0] : memref<4x128xf32, #tpu.memory_space<vmem>>, vector<4x128xf32>
    %c0_1 = arith.constant 0 : index
    %c0_2 = arith.constant 0 : index
    %1 = vector.load %arg4[%c0_1, %c0_2] : memref<1x128xi32, #tpu.memory_space<vmem>>, vector<1x128xi32>
    %cst = arith.constant 0.000000e+00 : f32
    %2 = vector.broadcast %cst : f32 to vector<4x128xf32>
    %c1_i32 = arith.constant 1 : i32
    %3 = tpu.dynamic_rotate %0 by %c1_i32 dim 1 : vector<4x128xf32>, i32 -> vector<4x128xf32>
    %c-1_i32 = arith.constant -1 : i32
    %4 = vector.broadcast %c-1_i32 : i32 to vector<1x128xi32>
    %5 = arith.addi %1, %4 : vector<1x128xi32>
    %c0_i32 = arith.constant 0 : i32
    %6 = vector.broadcast %c0_i32 : i32 to vector<1x128xi32>
    %7 = arith.cmpi sge, %5, %6 : vector<1x128xi32>
    %c-1_i32_3 = arith.constant -1 : i32
    %8 = vector.broadcast %c-1_i32_3 : i32 to vector<1x128xi32>
    %9 = arith.addi %1, %8 : vector<1x128xi32>
    %c16_i32 = arith.constant 16 : i32
    %10 = vector.broadcast %c16_i32 : i32 to vector<1x128xi32>
    %11 = arith.cmpi slt, %9, %10 : vector<1x128xi32>
    %12 = arith.andi %7, %11 : vector<1x128xi1>
    %cst_4 = arith.constant 0.000000e+00 : f32
    %13 = vector.broadcast %cst_4 : f32 to vector<4x128xf32>
    %14 = vector.shape_cast %12 : vector<1x128xi1> to vector<1x128xi1>
    %15 = vector.broadcast %14 : vector<1x128xi1> to vector<4x128xi1>
    %16 = arith.select %15, %3, %13 : vector<4x128xi1>, vector<4x128xf32>
    %c127_i32 = arith.constant 127 : i32
    %17 = tpu.dynamic_rotate %0 by %c127_i32 dim 1 : vector<4x128xf32>, i32 -> vector<4x128xf32>
    %c1_i32_5 = arith.constant 1 : i32
    %18 = vector.broadcast %c1_i32_5 : i32 to vector<1x128xi32>
    %19 = arith.addi %1, %18 : vector<1x128xi32>
    %c0_i32_6 = arith.constant 0 : i32
    %20 = vector.broadcast %c0_i32_6 : i32 to vector<1x128xi32>
    %21 = arith.cmpi sge, %19, %20 : vector<1x128xi32>
    %c1_i32_7 = arith.constant 1 : i32
    %22 = vector.broadcast %c1_i32_7 : i32 to vector<1x128xi32>
    %23 = arith.addi %1, %22 : vector<1x128xi32>
    %c16_i32_8 = arith.constant 16 : i32
    %24 = vector.broadcast %c16_i32_8 : i32 to vector<1x128xi32>
    %25 = arith.cmpi slt, %23, %24 : vector<1x128xi32>
    %26 = arith.andi %21, %25 : vector<1x128xi1>
    %cst_9 = arith.constant 0.000000e+00 : f32
    %27 = vector.broadcast %cst_9 : f32 to vector<4x128xf32>
    %28 = vector.shape_cast %26 : vector<1x128xi1> to vector<1x128xi1>
    %29 = vector.broadcast %28 : vector<1x128xi1> to vector<4x128xi1>
    %30 = arith.select %29, %17, %27 : vector<4x128xi1>, vector<4x128xf32>
    %31 = tpu.concatenate %16, %2, %0, %2, %30, %2 in 0 : vector<4x128xf32>, vector<4x128xf32>, vector<4x128xf32>, vector<4x128xf32>, vector<4x128xf32>, vector<4x128xf32> -> vector<24x128xf32>
    %c0_10 = arith.constant 0 : index
    %c0_11 = arith.constant 0 : index
    %32 = vector.load %arg2[%c0_10, %c0_11] : memref<8x24xf32, #tpu.memory_space<vmem>>, vector<8x24xf32>
    %cst_12 = arith.constant dense<0.000000e+00> : vector<8x128xf32>
    %33 = tpu.matmul %32, %31, %cst_12 {dimension_numbers = #tpu.dot_dimension_numbers<[1], [0], [0], [1], [0, 0, 1, 1], [], []>} : vector<8x24xf32>, vector<24x128xf32>, vector<8x128xf32> -> vector<8x128xf32>
    %c0_13 = arith.constant 0 : index
    %c0_14 = arith.constant 0 : index
    %34 = vector.load %arg3[%c0_13, %c0_14] : memref<8x1xf32, #tpu.memory_space<vmem>>, vector<8x1xf32>
    %35 = vector.broadcast %34 : vector<8x1xf32> to vector<8x128xf32>
    %36 = arith.addf %33, %35 : vector<8x128xf32>
    %c0_15 = arith.constant 0 : index
    %c0_16 = arith.constant 0 : index
    %37 = vector.load %arg5[%c0_15, %c0_16] : memref<8x128xf32, #tpu.memory_space<vmem>>, vector<8x128xf32>
    tpu.vector_store %arg5[%c0_15, %c0_16], %36 {strides = array<i32>} : memref<8x128xf32, #tpu.memory_space<vmem>>, vector<8x128xf32>,
    return
  }
  func.func @transform_0(%arg0: i32) -> (i32, i32) {
    %c0_i32 = arith.constant 0 : i32
    %c0_i32_0 = arith.constant 0 : i32
    return %c0_i32, %arg0 : i32, i32
  }
  func.func @transform_1(%arg0: i32) -> (i32, i32) {
    %c0_i32 = arith.constant 0 : i32
    %c0_i32_0 = arith.constant 0 : i32
    %c0_i32_1 = arith.constant 0 : i32
    return %c0_i32, %c0_i32_0 : i32, i32
  }
  func.func @transform_2(%arg0: i32) -> (i32, i32) {
    %c0_i32 = arith.constant 0 : i32
    %c0_i32_0 = arith.constant 0 : i32
    %c0_i32_1 = arith.constant 0 : i32
    return %c0_i32, %c0_i32_0 : i32, i32
  }
  func.func @transform_3(%arg0: i32) -> (i32, i32) {
    %c0_i32 = arith.constant 0 : i32
    %c0_i32_0 = arith.constant 0 : i32
    return %c0_i32, %arg0 : i32, i32
  }
  func.func @transform_4(%arg0: i32) -> (i32, i32) {
    %c0_i32 = arith.constant 0 : i32
    %c0_i32_0 = arith.constant 0 : i32
    return %c0_i32, %arg0 : i32, i32
  }
}

</mosaic_0001>

<llo_original>
// kernel: tpu_custom_call.1
$region0: #{tpu_custom_call.1}
  #allocation0 [shape = 'u32[]', space=smem, size = 0x4, offset = 0x4, fixed_abs, tag = 'smem constant byte address 0x4 - core index']
  #allocation1 [shape = 'u32[144,128]{1,0:T(1,128)}', space=vmem, size = 0x12000, scoped, tag = 'internal scratch']
  %s0 = inlined_call_operand.hbm [shape: f32[4,128], index: 0, kind: input, shape index: {}]
  %s1 = inlined_call_operand.vmem [shape: f32[8,24], index: 1, kind: input, shape index: {}]
  %s2 = inlined_call_operand.vmem [shape: f32[8,1], index: 2, kind: input, shape index: {}]
  %s3 = inlined_call_operand.vmem [shape: s32[1,128], index: 3, kind: input, shape index: {}]
  %s4 = inlined_call_operand.hbm [shape: f32[8,128], index: 4, kind: output, shape index: {}]
  %s5 = sld [smem:[#allocation0]]
  $region30: #{tpu_custom_call.1} parent=0
    _
  %s7 = ssub.s32 1, %s5
  %s8 = scalar_select 0, %s7, %s5
  $region1: #{tpu_custom_call.1} parent=0
    #allocation2 [shape = 'u8[2048]{0}', space=vmem, size = 0x800, scoped, tag = 'input window, operand 0, single buffered']
    #allocation3 [shape = 's32[1]{0}', space=sflag, size = 0x4, scoped, tag = 'scoped memory for tpu_custom_call.1']
    #allocation4 [shape = 's32[1]{0}', space=sflag, size = 0x4, scoped, tag = 'scoped memory for tpu_custom_call.1']
    #allocation5 [shape = 'u8[4096]{0}', space=vmem, size = 0x1000, scoped, tag = 'output window, operand 0, single buffered']
    %9 = vsyncpa [#allocation3], 0
    %10 = vsyncpa [#allocation4], 0
    // Predicated region
    $region2: #{tpu_custom_call.1} parent=1 // pred_check
      _
    $region3: #{tpu_custom_call.1} parent=1 // pred_check_branch
      %12 = sbr.rel (0) target = $region5
    $region4: #{tpu_custom_call.1} parent=1 // pred_region
      %s14 = ssub.s32 64, 64
      %15 = vsyncadd [#allocation3], %s14
      %s17 = sshll.u32 [#allocation2], 4
      %s18 = int_to_ptr.vmem [resolvable:$true] %s17
      %20 = dma.hbm_to_vmem [thread:$0]  %s0, 64, %s18, [#allocation3]
    $region5: #{tpu_custom_call.1} parent=1 // pred_fallthru
      _
    // Predicated region
    $region6: #{tpu_custom_call.1} parent=1 // pred_check
      _
    $region7: #{tpu_custom_call.1} parent=1 // pred_check_branch
      %22 = sbr.rel (0) target = $region9
    $region8: #{tpu_custom_call.1} parent=1 // pred_region
      _
    $region9: #{tpu_custom_call.1} parent=1 // pred_fallthru
      _
    // Predicated region
    $region10: #{tpu_custom_call.1} parent=1 // pred_check
      _
    $region11: #{tpu_custom_call.1} parent=1 // pred_check_branch
      %24 = sbr.rel (0) target = $region13
    $region12: #{tpu_custom_call.1} parent=1 // pred_region
      _
    $region13: #{tpu_custom_call.1} parent=1 // pred_fallthru
      _
    // Predicated region
    $region14: #{tpu_custom_call.1} parent=1 // pred_check
      _
    $region15: #{tpu_custom_call.1} parent=1 // pred_check_branch
      %26 = sbr.rel (0) target = $region17
    $region16: #{tpu_custom_call.1} parent=1 // pred_region
      _
    $region17: #{tpu_custom_call.1} parent=1 // pred_fallthru
      _
    // Predicated region
    $region18: #{tpu_custom_call.1} parent=1 // pred_check
      _
    $region19: #{tpu_custom_call.1} parent=1 // pred_check_branch
      %28 = sbr.rel (0) target = $region21
    $region20: #{tpu_custom_call.1} parent=1 // pred_region
      %29 = dma.done [#allocation3], 64
    $region21: #{tpu_custom_call.1} parent=1 // pred_fallthru
      _
    %v30 = vld [vmem:[#allocation2] sm:$0xf]
    %v31 = vld [vmem:[%s3] sm:$0x1]
    %32 = vrot.lane.b32.xlu0 %v30, 1
    %v33 = vpop.permute.xlu0 %32
    %v34 = vadd.s32 %v31, 4294967295
    %vm35 = vcmp.ge.s32.totalorder %v34, 0
    %vm36 = vcmp.lt.s32.totalorder %v34, 16
    %vm37 = vmand %vm35, %vm36
    %v38 = vsel %vm37, 1, 0
    %v39 = vlaneseq
    %v40 = vshrl.u32 %v39, 7
    %v41 = vsub.s32 0, %v40
    %v42 = vrot.slane %v38, %v41
    %vm43 = vcmp.eq.s32.totalorder %v42, 1
    %v44 = vsel %vm43, %v33, 0.0
    %45 = vrot.lane.b32.xlu0 %v30, 127
    %v46 = vpop.permute.xlu0 %45
    %v47 = vadd.s32 %v31, 1
    %vm48 = vcmp.ge.s32.totalorder %v47, 0
    %vm49 = vcmp.lt.s32.totalorder %v47, 16
    %vm50 = vmand %vm48, %vm49
    %v51 = vsel %vm50, 1, 0
    %v52 = vlaneseq
    %v53 = vshrl.u32 %v52, 7
    %v54 = vsub.s32 0, %v53
    %v55 = vrot.slane %v51, %v54
    %vm56 = vcmp.eq.s32.totalorder %v55, 1
    %v57 = vsel %vm56, %v46, 0.0
    %vm58 = vcmask 1043456
    %v59 = vsel %vm58, %v44, 0.0
    %v60 = vsel %vm58, %v30, 0.0
    %v61 = vsel %vm58, %v57, 0.0
    %v62 = vld [vmem:[%s1] sm:$0xff]
    %v63 = vld [vmem:[%s2] sm:$0xff]
    %65 = vset.pattern.permute.xlu0 0
    %66 = vperm.xlu0 %65, %v63
    %v67 = vpop.permute.xlu0 %66
    %vm69 = vcmask 195584
    %v71 = vsel %vm69, %v62, 0
    %73 = vmatprep.subr.mxu0 0.0
    %74 = vmatpush1.msra.mxu0 0.0
    %75 = vmatprep.subr.mxu0 0.0
    %76 = vmatpush1.msra.mxu0 0.0
    %77 = vmatprep.subr.mxu0 0.0
    %78 = vmatpush1.msra.mxu0 0.0
    %79 = vmatprep.subr.mxu0 0.0
    %80 = vmatpush1.msra.mxu0 0.0
    %81 = vmatprep.subr.mxu0 0.0
    %82 = vmatpush1.msra.mxu0 0.0
    %83 = vmatprep.subr.mxu0 0.0
    %84 = vmatpush1.msra.mxu0 0.0
    %85 = vmatprep.subr.mxu0 0.0
    %86 = vmatpush1.msra.mxu0 0.0
    %87 = vmatprep.subr.mxu0 0.0
    %88 = vmatpush1.msra.mxu0 0.0
    %89 = vmatprep.subr.mxu0 0.0
    %90 = vmatpush1.msra.mxu0 0.0
    %91 = vmatprep.subr.mxu0 0.0
    %92 = vmatpush1.msra.mxu0 0.0
    %93 = vmatprep.subr.mxu0 0.0
    %94 = vmatpush1.msra.mxu0 0.0
    %95 = vmatprep.subr.mxu0 0.0
    %96 = vmatpush1.msra.mxu0 0.0
    %97 = vmatprep.subr.mxu0 0.0
    %98 = vmatpush1.msra.mxu0 0.0
    %99 = vmatprep.subr.mxu0 0.0
    %100 = vmatpush1.msra.mxu0 %v61
    %101 = vmatprep.subr.mxu0 0.0
    %102 = vmatpush1.msra.mxu0 %v60
    %103 = vmatprep.subr.mxu0 0.0
    %104 = vmatpush1.msra.mxu0 %v59
    %105 = vmatprep.subr.mxu0 0.0
    %106 = vmatpush2.msra.mxu0 0.0
    %107 = vmatprep.subr.mxu0 0.0
    %108 = vmatpush2.msra.mxu0 0.0
    %109 = vmatprep.subr.mxu0 0.0
    %110 = vmatpush2.msra.mxu0 0.0
    %111 = vmatprep.subr.mxu0 0.0
    %112 = vmatpush2.msra.mxu0 0.0
    %113 = vmatprep.subr.mxu0 0.0
    %114 = vmatpush2.msra.mxu0 0.0
    %115 = vmatprep.subr.mxu0 0.0
    %116 = vmatpush2.msra.mxu0 0.0
    %117 = vmatprep.subr.mxu0 0.0
    %118 = vmatpush2.msra.mxu0 0.0
    %119 = vmatprep.subr.mxu0 0.0
    %120 = vmatpush2.msra.mxu0 0.0
    %121 = vmatprep.subr.mxu0 0.0
    %122 = vmatpush2.msra.mxu0 0.0
    %123 = vmatprep.subr.mxu0 0.0
    %124 = vmatpush2.msra.mxu0 0.0
    %125 = vmatprep.subr.mxu0 0.0
    %126 = vmatpush2.msra.mxu0 0.0
    %127 = vmatprep.subr.mxu0 0.0
    %128 = vmatpush2.msra.mxu0 0.0
    %129 = vmatprep.subr.mxu0 0.0
    %130 = vmatpush2.msra.mxu0 0.0
    %131 = vmatprep.subr.mxu0 0.0
    %132 = vmatpush2.msra.mxu0 0.0
    %133 = vmatprep.subr.mxu0 0.0
    %134 = vmatpush2.msra.mxu0 0.0
    %135 = vmatprep.subr.mxu0 0.0
    %136 = vmatpush2.msra.mxu0 0.0
    %137 = vmatprep.mubr.f32.mxu0 0.0
    %138 = vmatmul.mubr.f32.gmra.mxu0 %v71
    %v139 = vpop.f32.mrf.mxu0
    %v140 = vadd.f32 %v67, %v139
    %v141 = vpop.f32.mrf.mxu0
    %142 = vdwg.mxu0
    %143 = vst [vmem:[#allocation5] sm:$0xff] %v140
    // Predicated region
    $region22: #{tpu_custom_call.1} parent=1 // pred_check
      _
    $region23: #{tpu_custom_call.1} parent=1 // pred_check_branch
      %145 = sbr.rel (0) target = $region25
    $region24: #{tpu_custom_call.1} parent=1 // pred_region
      %s147 = ssub.s32 128, 128
      %148 = vsyncadd [#allocation4], %s147
      %s150 = sshll.u32 [#allocation5], 4
      %s151 = int_to_ptr.vmem [resolvable:$true] %s150
      %153 = dma.vmem_to_hbm [thread:$0]  %s151, 128, %s4, [#allocation4]
    $region25: #{tpu_custom_call.1} parent=1 // pred_fallthru
      _
    // Predicated region
    $region26: #{tpu_custom_call.1} parent=1 // pred_check
      _
    $region27: #{tpu_custom_call.1} parent=1 // pred_check_branch
      %155 = sbr.rel (0) target = $region29
    $region28: #{tpu_custom_call.1} parent=1 // pred_region
      %156 = dma.done [#allocation4], 128
    $region29: #{tpu_custom_call.1} parent=1 // pred_fallthru
      _
    %157 = vsyncpa [#allocation3], 1
    %158 = vsyncpa [#allocation4], 1

</llo_original>
